<compile_context>
chip_gen: v5e
topology: v5e:2x2
jax: 0.10.0
libtpu: 0.0.40
codegen_flags: <defaults>
</compile_context>

<pallas_src>
import functools
from typing import Dict, NamedTuple, Tuple

import jax
import jax.numpy as jnp
from jax.experimental import pallas as pl
from jax.experimental.pallas import tpu as pltpu


def _round_up(x, m):
    return (x + m - 1) // m * m


# ---------------------------------------------------------------------------
# Kernel: one column-tile of   y = x @ W_cat + b_cat
# ---------------------------------------------------------------------------
def _hypernet_kernel(x_ref, w_ref, b_ref, o_ref):
    # (B, d_in) @ (d_in, tile_n) on the MXU, f32 accumulation, + f32 bias.
    acc = jnp.dot(x_ref[...], w_ref[...], preferred_element_type=jnp.float32)
    o_ref[...] = (acc + b_ref[...]).astype(o_ref.dtype)


# ---------------------------------------------------------------------------
# One-time packing of the per-head Linear parameters.
# ---------------------------------------------------------------------------
class PackedHyperNet(NamedTuple):
    w_tiles: jax.Array                   # (n_tiles, d_in, tile_n), weight dtype
    b_cat: jax.Array                     # (1, n_pad), float32
    slices: Dict[str, Tuple[int, int]]   # key -> (128-aligned offset, fout)
    d_in: int
    tile_n: int
    n_pad: int


def pack_hypernet_params(params, struct, *,
                         weight_dtype=jnp.bfloat16,
                         target_tile_bytes=2 * 1024 * 1024,
                         single_block_max_bytes=8 * 1024 * 1024):
    """Pack all heads' (d_in, fout) weights / (fout,) biases once.

    - Each head gets a 128-aligned column slot (lane-aligned output slices).
    - tile_n is chosen by bytes (~target_tile_bytes of weights per tile); if
      the whole packed weight is small enough, everything becomes one block.
    - Weights are stored as (n_tiles, d_in, tile_n) so each tile is one
      contiguous HBM chunk for the DMA engine.
    Call this once and reuse the returned PackedHyperNet across forward calls.
    """
    keys = list(struct.keys())           # single canonical key order
    d_in = struct[keys[0]][0]
    w_itemsize = jnp.dtype(weight_dtype).itemsize

    # 128-aligned per-head slots.
    slices, off = {}, 0
    for k in keys:
        fin, fout = struct[k]
        assert fin == d_in, "HyperNet: all heads read the same control signal"
        slices[k] = (off, fout)
        off += _round_up(fout, 128)
    n_total = off

    # Size the column tile by bytes, not columns.
    total_w_bytes = n_total * d_in * w_itemsize
    if total_w_bytes <= single_block_max_bytes:
        tile_n = _round_up(n_total, 128)           # single block, no pipeline
    else:
        tile_n = max(128, (target_tile_bytes // (d_in * w_itemsize)) // 128 * 128)
        tile_n = min(tile_n, _round_up(n_total, 128))
    n_pad = _round_up(n_total, tile_n)
    n_tiles = n_pad // tile_n

    # Build the padded concatenation (zero-filled padding is sliced away).
    w_cat = jnp.zeros((d_in, n_pad), jnp.float32)
    b_cat = jnp.zeros((n_pad,), jnp.float32)
    for k in keys:
        s, n = slices[k]
        w_cat = w_cat.at[:, s:s + n].set(params[k]["w"])
        b_cat = b_cat.at[s:s + n].set(params[k]["b"])

    # (d_in, n_pad) -> (n_tiles, d_in, tile_n): tile j is a contiguous chunk.
    w_tiles = (w_cat.reshape(d_in, n_tiles, tile_n)
                    .transpose(1, 0, 2)
                    .astype(weight_dtype))
    b_cat = b_cat.reshape(1, n_pad).astype(jnp.float32)
    return PackedHyperNet(w_tiles=jax.device_put(w_tiles),
                          b_cat=jax.device_put(b_cat),
                          slices=slices, d_in=d_in, tile_n=tile_n, n_pad=n_pad)


# ---------------------------------------------------------------------------
# Fused matmul over all heads.
# ---------------------------------------------------------------------------
@functools.partial(jax.jit, static_argnames=("tile_n", "n_pad", "out_dtype"))
def _hypernet_matmul(x, w_tiles, b_cat, *, tile_n, n_pad, out_dtype):
    B, d_in = x.shape
    n_tiles = n_pad // tile_n
    w_itemsize = jnp.dtype(w_tiles.dtype).itemsize
    out_itemsize = jnp.dtype(out_dtype).itemsize

    # VMEM working set per buffered step (W tile + bias tile + out tile).
    block_bytes = (d_in * tile_n * w_itemsize
                   + tile_n * 4
                   + B * tile_n * out_itemsize)
    # Double/triple buffered blocks + resident x + slack; clamped under the
    # v7x scoped default (32 MiB) so a tile sized here never spills on the
    # 64 MiB-VMEM generation (v5e/v6e have ample headroom).
    vmem_limit = int(min(max(4 * block_bytes + B * d_in * w_itemsize + (1 << 20),
                             16 * 1024 * 1024),
                         32 * 1024 * 1024))

    # If many small weight tiles are unavoidable, deepen the W pipeline so the
    # short per-step matmul does not expose DMA issue latency.
    w_spec_kwargs = {}
    if n_tiles >= 3 and d_in * tile_n * w_itemsize < 512 * 1024:
        w_spec_kwargs["pipeline_mode"] = pl.Buffered(3)

    cost = pl.CostEstimate(
        flops=2 * B * d_in * n_pad,
        transcendentals=0,
        bytes_accessed=int(w_tiles.size * w_itemsize + b_cat.size * 4
                           + B * d_in * w_itemsize + B * n_pad * out_itemsize),
    )

    return pl.pallas_call(
        _hypernet_kernel,
        out_shape=jax.ShapeDtypeStruct((B, n_pad), out_dtype),
        grid_spec=pltpu.PrefetchScalarGridSpec(
            num_scalar_prefetch=0,
            grid=(n_tiles,),
            in_specs=[
                # Control signal: resident, whole array every step.
                pl.BlockSpec((B, d_in), lambda j: (0, 0)),
                # Weights: one contiguous (d_in, tile_n) chunk per step.
                pl.BlockSpec((None, d_in, tile_n), lambda j: (j, 0, 0),
                             **w_spec_kwargs),
                # Bias tile (f32).
                pl.BlockSpec((1, tile_n), lambda j: (0, j)),
            ],
            out_specs=pl.BlockSpec((B, tile_n), lambda j: (0, j)),
        ),
        compiler_params=pltpu.CompilerParams(
            # No reduction axis -> every grid step is independent; on v7x this
            # lets both TensorCores stream disjoint halves of the weights.
            dimension_semantics=("parallel",),
            vmem_limit_bytes=vmem_limit),
        cost_estimate=cost,
    )(x.astype(w_tiles.dtype), w_tiles, b_cat)


def hypernet_forward(control_signal, packed: PackedHyperNet, *,
                     out_dtype=jnp.float32):
    """JAX/Pallas equivalent of HyperNet.forward: {key: Linear_key(control)}."""
    out = _hypernet_matmul(control_signal, packed.w_tiles, packed.b_cat,
                           tile_n=packed.tile_n, n_pad=packed.n_pad,
                           out_dtype=out_dtype)
    # 128-aligned starts -> these slices are free lane-aligned views.
    return {k: out[:, s:s + n] for k, (s, n) in packed.slices.items()}


def _reference_forward(control_signal, params, struct):
    """Pure-JAX f32 reference (mirrors the PyTorch module exactly)."""
    return {k: control_signal @ params[k]["w"] + params[k]["b"] for k in struct}


if __name__ == "__main__":
    key = jax.random.PRNGKey(0)
    D_IN, B = 64, 2
    # hyper-network "struct": key -> (in_features, out_features)
    struct = {
        "conv1_weight": (D_IN, 384),
        "conv1_bias":   (D_IN, 96),    # not a multiple of 128 -> exercises padding
        "fc_weight":    (D_IN, 512),
    }

    kx, key = jax.random.split(key)
    params = {}
    for name, (fin, fout) in struct.items():
        kw, kb, key = jax.random.split(key, 3)
        bound = 1.0 / fin ** 0.5                  # nn.Linear default init scale
        params[name] = {
            "w": jax.random.uniform(kw, (fin, fout), jnp.float32, -bound, bound),
            "b": jax.random.uniform(kb, (fout,), jnp.float32, -bound, bound),
        }
    control = jax.random.normal(kx, (B, D_IN), jnp.float32)

    ref = _reference_forward(control, params, struct)

    # Pack ONCE (128 KiB bf16 weights -> single block, grid=(1,)); reuse it.
    packed = pack_hypernet_params(params, struct)
    out = jax.block_until_ready(hypernet_forward(control, packed))
    for k, (fin, fout) in struct.items():
        assert out[k].shape == (B, fout) and out[k].dtype == jnp.float32
        # bf16 weight/activation cast changes numerics slightly vs f32 ref.
        assert jnp.allclose(out[k], ref[k], atol=3e-2, rtol=3e-2), k

    # Second call reuses the same packed tensors (no re-pack, no re-cast).
    out_again = jax.block_until_ready(hypernet_forward(control, packed))
    for k in struct:
        assert jnp.allclose(out_again[k], out[k]), k

    # Also exercise the multi-tile grid path (force small tiles for coverage).
    packed_tiled = pack_hypernet_params(params, struct,
                                        target_tile_bytes=64 * 1024,
                                        single_block_max_bytes=0)
    out_tiled = jax.block_until_ready(hypernet_forward(control, packed_tiled))
    for k in struct:
        assert jnp.allclose(out_tiled[k], ref[k], atol=3e-2, rtol=3e-2), k

    print("KERNEL_OK")
</pallas_src>

<mosaic_0001>
module attributes {stable_mosaic.version = 11 : i64} {
  func.func @_hypernet_kernel(%arg0: i32, %arg1: memref<2x64xbf16, #tpu.memory_space<vmem>>, %arg2: memref<1x64x1024xbf16, #tpu.memory_space<vmem>>, %arg3: memref<1x1024xf32, #tpu.memory_space<vmem>>, %arg4: memref<2x1024xf32, #tpu.memory_space<vmem>>) attributes {dimension_semantics = [#tpu.dimension_semantics<parallel>], iteration_bounds = array<i64: 1>, scalar_prefetch = 0 : i64, scratch_operands = 0 : i64, tpu.core_type = #tpu.core_type<tc>, window_params = [{pipeline_mode = #tpu.pipeline_mode<synchronous>, transform_indices = @transform_0, window_bounds = array<i64: 2, 64>}, {transform_indices = @transform_1, window_bounds = array<i64: 1, 64, 1024>}, {transform_indices = @transform_2, window_bounds = array<i64: 1, 1024>}, {transform_indices = @transform_3, window_bounds = array<i64: 2, 1024>}]} {
    %c0 = arith.constant 0 : index
    %c0_0 = arith.constant 0 : index
    %0 = vector.load %arg1[%c0, %c0_0] : memref<2x64xbf16, #tpu.memory_space<vmem>>, vector<2x64xbf16>
    %c0_1 = arith.constant 0 : index
    %c0_2 = arith.constant 0 : index
    %c0_3 = arith.constant 0 : index
    %1 = vector.load %arg2[%c0_1, %c0_2, %c0_3] : memref<1x64x1024xbf16, #tpu.memory_space<vmem>>, vector<1x64x1024xbf16>
    %2 = vector.shape_cast %1 : vector<1x64x1024xbf16> to vector<64x1024xbf16>
    %cst = arith.constant dense<0.000000e+00> : vector<2x1024xf32>
    %3 = tpu.matmul %0, %2, %cst {dimension_numbers = #tpu.dot_dimension_numbers<[1], [0], [0], [1], [0, 0, 1, 1], [], []>} : vector<2x64xbf16>, vector<64x1024xbf16>, vector<2x1024xf32> -> vector<2x1024xf32>
    %c0_4 = arith.constant 0 : index
    %c0_5 = arith.constant 0 : index
    %4 = vector.load %arg3[%c0_4, %c0_5] : memref<1x1024xf32, #tpu.memory_space<vmem>>, vector<1x1024xf32>
    %5 = vector.broadcast %4 : vector<1x1024xf32> to vector<2x1024xf32>
    %6 = arith.addf %3, %5 : vector<2x1024xf32>
    %c0_6 = arith.constant 0 : index
    %c0_7 = arith.constant 0 : index
    %7 = vector.load %arg4[%c0_6, %c0_7] : memref<2x1024xf32, #tpu.memory_space<vmem>>, vector<2x1024xf32>
    tpu.vector_store %arg4[%c0_6, %c0_7], %6 {strides = array<i32>} : memref<2x1024xf32, #tpu.memory_space<vmem>>, vector<2x1024xf32>,
    return
  }
  func.func @transform_0(%arg0: i32) -> (i32, i32) {
    %c0_i32 = arith.constant 0 : i32
    %c0_i32_0 = arith.constant 0 : i32
    %c0_i32_1 = arith.constant 0 : i32
    return %c0_i32, %c0_i32_0 : i32, i32
  }
  func.func @transform_1(%arg0: i32) -> (i32, i32, i32) {
    %c0_i32 = arith.constant 0 : i32
    %c0_i32_0 = arith.constant 0 : i32
    %c0_i32_1 = arith.constant 0 : i32
    return %arg0, %c0_i32, %c0_i32_0 : i32, i32, i32
  }
  func.func @transform_2(%arg0: i32) -> (i32, i32) {
    %c0_i32 = arith.constant 0 : i32
    %c0_i32_0 = arith.constant 0 : i32
    return %c0_i32, %arg0 : i32, i32
  }
  func.func @transform_3(%arg0: i32) -> (i32, i32) {
    %c0_i32 = arith.constant 0 : i32
    %c0_i32_0 = arith.constant 0 : i32
    return %c0_i32, %arg0 : i32, i32
  }
}

</mosaic_0001>

<llo_original>
// kernel: _hypernet_matmul.1
$region0: #{_hypernet_matmul.1}
  #allocation0 [shape = 'u32[]', space=smem, size = 0x4, offset = 0x4, fixed_abs, tag = 'smem constant byte address 0x4 - core index']
  #allocation1 [shape = 'u32[72,128]{1,0:T(1,128)}', space=vmem, size = 0x9000, scoped, tag = 'internal scratch']
  %s0 = inlined_call_operand.vmem [shape: bf16[2,64], index: 0, kind: input, shape index: {}]
  %s1 = inlined_call_operand.hbm [shape: bf16[1,64,1024], index: 1, kind: input, shape index: {}]
  %s2 = inlined_call_operand.hbm [shape: f32[1,1024], index: 2, kind: input, shape index: {}]
  %s3 = inlined_call_operand.hbm [shape: f32[2,1024], index: 3, kind: output, shape index: {}]
  %s4 = sld [smem:[#allocation0]]
  $region30: #{_hypernet_matmul.1} parent=0
    _
  %s6 = ssub.s32 1, %s4
  %s7 = scalar_select 0, %s6, %s4
  $region1: #{_hypernet_matmul.1} parent=0
    #allocation2 [shape = 'u8[131072]{0}', space=vmem, size = 0x20000, scoped, tag = 'input window, operand 1, single buffered']
    #allocation3 [shape = 's32[1]{0}', space=sflag, size = 0x4, scoped, tag = 'scoped memory for _hypernet_matmul.1']
    #allocation4 [shape = 's32[1]{0}', space=sflag, size = 0x4, scoped, tag = 'scoped memory for _hypernet_matmul.1']
    #allocation5 [shape = 'u8[4096]{0}', space=vmem, size = 0x1000, scoped, tag = 'input window, operand 2, single buffered']
    #allocation6 [shape = 's32[1]{0}', space=sflag, size = 0x4, scoped, tag = 'scoped memory for _hypernet_matmul.1']
    #allocation7 [shape = 'u8[8192]{0}', space=vmem, size = 0x2000, scoped, tag = 'output window, operand 0, single buffered']
    %8 = vsyncpa [#allocation3], 0
    %9 = vsyncpa [#allocation6], 0
    %10 = vsyncpa [#allocation4], 0
    // Predicated region
    $region2: #{_hypernet_matmul.1} parent=1 // pred_check
      _
    $region3: #{_hypernet_matmul.1} parent=1 // pred_check_branch
      %12 = sbr.rel (0) target = $region5
    $region4: #{_hypernet_matmul.1} parent=1 // pred_region
      _
    $region5: #{_hypernet_matmul.1} parent=1 // pred_fallthru
      _
    // Predicated region
    $region6: #{_hypernet_matmul.1} parent=1 // pred_check
      _
    $region7: #{_hypernet_matmul.1} parent=1 // pred_check_branch
      %14 = sbr.rel (0) target = $region9
    $region8: #{_hypernet_matmul.1} parent=1 // pred_region
      %16 = vsyncadd [#allocation3], 0
      %s17 = sshll.u32 %s1, 4
      %s18 = int_to_ptr.hbm [resolvable:$true] %s17
      %s19 = sshll.u32 [#allocation2], 4
      %s20 = int_to_ptr.vmem [resolvable:$true] %s19
      %25 = dma.hbm_to_vmem [thread:$0]  %s18, 4096, %s20, [#allocation3], 512, 512, 32
    $region9: #{_hypernet_matmul.1} parent=1 // pred_fallthru
      _
    // Predicated region
    $region10: #{_hypernet_matmul.1} parent=1 // pred_check
      _
    $region11: #{_hypernet_matmul.1} parent=1 // pred_check_branch
      %27 = sbr.rel (0) target = $region13
    $region12: #{_hypernet_matmul.1} parent=1 // pred_region
      %29 = vsyncadd [#allocation6], 0
      %s31 = sshll.u32 %s2, 4
      %s32 = int_to_ptr.hbm [resolvable:$true] %s31
      %s33 = sshll.u32 [#allocation5], 4
      %s34 = int_to_ptr.vmem [resolvable:$true] %s33
      %36 = dma.hbm_to_vmem [thread:$0]  %s32, 128, %s34, [#allocation6]
    $region13: #{_hypernet_matmul.1} parent=1 // pred_fallthru
      _
    // Predicated region
    $region14: #{_hypernet_matmul.1} parent=1 // pred_check
      _
    $region15: #{_hypernet_matmul.1} parent=1 // pred_check_branch
      %38 = sbr.rel (0) target = $region17
    $region16: #{_hypernet_matmul.1} parent=1 // pred_region
      %40 = dma.done [#allocation3], 4096
    $region17: #{_hypernet_matmul.1} parent=1 // pred_fallthru
      _
    // Predicated region
    $region18: #{_hypernet_matmul.1} parent=1 // pred_check
      _
    $region19: #{_hypernet_matmul.1} parent=1 // pred_check_branch
      %42 = sbr.rel (0) target = $region21
    $region20: #{_hypernet_matmul.1} parent=1 // pred_region
      %44 = dma.done [#allocation6], 128
    $region21: #{_hypernet_matmul.1} parent=1 // pred_fallthru
      _
    %v46 = vld [vmem:[%s0] sm:$0x1]
    %v47 = vld [vmem:[#allocation2] sm:$0xff]
    %v48 = vld [vmem:[#allocation2 + $0x8] sm:$0xff]
    %v49 = vld [vmem:[#allocation2 + $0x10] sm:$0xff]
    %v50 = vld [vmem:[#allocation2 + $0x18] sm:$0xff]
    %v51 = vld [vmem:[#allocation2 + $0x20] sm:$0xff]
    %v52 = vld [vmem:[#allocation2 + $0x28] sm:$0xff]
    %v53 = vld [vmem:[#allocation2 + $0x30] sm:$0xff]
    %v54 = vld [vmem:[#allocation2 + $0x38] sm:$0xff]
    %v55 = vld [vmem:[#allocation2 + $0x40] sm:$0xff]
    %v56 = vld [vmem:[#allocation2 + $0x48] sm:$0xff]
    %v57 = vld [vmem:[#allocation2 + $0x50] sm:$0xff]
    %v58 = vld [vmem:[#allocation2 + $0x58] sm:$0xff]
    %v59 = vld [vmem:[#allocation2 + $0x60] sm:$0xff]
    %v60 = vld [vmem:[#allocation2 + $0x68] sm:$0xff]
    %v61 = vld [vmem:[#allocation2 + $0x70] sm:$0xff]
    %v62 = vld [vmem:[#allocation2 + $0x78] sm:$0xff]
    %v63 = vld [vmem:[#allocation2 + $0x80] sm:$0xff]
    %v64 = vld [vmem:[#allocation2 + $0x88] sm:$0xff]
    %v65 = vld [vmem:[#allocation2 + $0x90] sm:$0xff]
    %v66 = vld [vmem:[#allocation2 + $0x98] sm:$0xff]
    %v67 = vld [vmem:[#allocation2 + $0xa0] sm:$0xff]
    %v68 = vld [vmem:[#allocation2 + $0xa8] sm:$0xff]
    %v69 = vld [vmem:[#allocation2 + $0xb0] sm:$0xff]
    %v70 = vld [vmem:[#allocation2 + $0xb8] sm:$0xff]
    %v71 = vld [vmem:[#allocation2 + $0xc0] sm:$0xff]
    %v72 = vld [vmem:[#allocation2 + $0xc8] sm:$0xff]
    %v73 = vld [vmem:[#allocation2 + $0xd0] sm:$0xff]
    %v74 = vld [vmem:[#allocation2 + $0xd8] sm:$0xff]
    %v75 = vld [vmem:[#allocation2 + $0xe0] sm:$0xff]
    %v76 = vld [vmem:[#allocation2 + $0xe8] sm:$0xff]
    %v77 = vld [vmem:[#allocation2 + $0xf0] sm:$0xff]
    %v78 = vld [vmem:[#allocation2 + $0xf8] sm:$0xff]
    %v79 = vld [vmem:[#allocation5] sm:$0xff]
    %v81 = vperm.slane %v79, 0
    %v82 = vperm.slane %v79, 1
    %v83 = vperm.slane %v79, 2
    %v84 = vperm.slane %v79, 3
    %v85 = vperm.slane %v79, 4
    %v86 = vperm.slane %v79, 5
    %v87 = vperm.slane %v79, 6
    %v88 = vperm.slane %v79, 7
    %v129 = vunpack.c.l.b16 %v47
    %v130 = vunpack.c.h.b16 %v47
    %v131 = vunpack.c.l.b16 %v48
    %v132 = vunpack.c.h.b16 %v48
    %v133 = vunpack.c.l.b16 %v49
    %v134 = vunpack.c.h.b16 %v49
    %v135 = vunpack.c.l.b16 %v50
    %v136 = vunpack.c.h.b16 %v50
    %v137 = vunpack.c.l.b16 %v51
    %v138 = vunpack.c.h.b16 %v51
    %v139 = vunpack.c.l.b16 %v52
    %v140 = vunpack.c.h.b16 %v52
    %v141 = vunpack.c.l.b16 %v53
    %v142 = vunpack.c.h.b16 %v53
    %v143 = vunpack.c.l.b16 %v54
    %v144 = vunpack.c.h.b16 %v54
    %v145 = vunpack.c.l.b16 %v55
    %v146 = vunpack.c.h.b16 %v55
    %v147 = vunpack.c.l.b16 %v56
    %v148 = vunpack.c.h.b16 %v56
    %v149 = vunpack.c.l.b16 %v57
    %v150 = vunpack.c.h.b16 %v57
    %v151 = vunpack.c.l.b16 %v58
    %v152 = vunpack.c.h.b16 %v58
    %v153 = vunpack.c.l.b16 %v59
    %v154 = vunpack.c.h.b16 %v59
    %v155 = vunpack.c.l.b16 %v60
    %v156 = vunpack.c.h.b16 %v60
    %v157 = vunpack.c.l.b16 %v61
    %v158 = vunpack.c.h.b16 %v61
    %v159 = vunpack.c.l.b16 %v62
    %v160 = vunpack.c.h.b16 %v62
    %v161 = vunpack.c.l.b16 %v63
    %v162 = vunpack.c.h.b16 %v63
    %v163 = vunpack.c.l.b16 %v64
    %v164 = vunpack.c.h.b16 %v64
    %v165 = vunpack.c.l.b16 %v65
    %v166 = vunpack.c.h.b16 %v65
    %v167 = vunpack.c.l.b16 %v66
    %v168 = vunpack.c.h.b16 %v66
    %v169 = vunpack.c.l.b16 %v67
    %v170 = vunpack.c.h.b16 %v67
    %v171 = vunpack.c.l.b16 %v68
    %v172 = vunpack.c.h.b16 %v68
    %v173 = vunpack.c.l.b16 %v69
    %v174 = vunpack.c.h.b16 %v69
    %v175 = vunpack.c.l.b16 %v70
    %v176 = vunpack.c.h.b16 %v70
    %v177 = vunpack.c.l.b16 %v71
    %v178 = vunpack.c.h.b16 %v71
    %v179 = vunpack.c.l.b16 %v72
    %v180 = vunpack.c.h.b16 %v72
    %v181 = vunpack.c.l.b16 %v73
    %v182 = vunpack.c.h.b16 %v73
    %v183 = vunpack.c.l.b16 %v74
    %v184 = vunpack.c.h.b16 %v74
    %v185 = vunpack.c.l.b16 %v75
    %v186 = vunpack.c.h.b16 %v75
    %v187 = vunpack.c.l.b16 %v76
    %v188 = vunpack.c.h.b16 %v76
    %v189 = vunpack.c.l.b16 %v77
    %v190 = vunpack.c.h.b16 %v77
    %v191 = vunpack.c.l.b16 %v78
    %v192 = vunpack.c.h.b16 %v78
    %v193 = vpack.c.b16 %v137, %v129
    %v194 = vpack.c.b16 %v138, %v130
    %v195 = vpack.c.b16 %v139, %v131
    %v196 = vpack.c.b16 %v140, %v132
    %v197 = vpack.c.b16 %v141, %v133
    %v198 = vpack.c.b16 %v142, %v134
    %v199 = vpack.c.b16 %v143, %v135
    %v200 = vpack.c.b16 %v144, %v136
    %v201 = vpack.c.b16 %v153, %v145
    %v202 = vpack.c.b16 %v154, %v146
    %v203 = vpack.c.b16 %v155, %v147
    %v204 = vpack.c.b16 %v156, %v148
    %v205 = vpack.c.b16 %v157, %v149
    %v206 = vpack.c.b16 %v158, %v150
    %v207 = vpack.c.b16 %v159, %v151
    %v208 = vpack.c.b16 %v160, %v152
    %v209 = vpack.c.b16 %v169, %v161
    %v210 = vpack.c.b16 %v170, %v162
    %v211 = vpack.c.b16 %v171, %v163
    %v212 = vpack.c.b16 %v172, %v164
    %v213 = vpack.c.b16 %v173, %v165
    %v214 = vpack.c.b16 %v174, %v166
    %v215 = vpack.c.b16 %v175, %v167
    %v216 = vpack.c.b16 %v176, %v168
    %v217 = vpack.c.b16 %v185, %v177
    %v218 = vpack.c.b16 %v186, %v178
    %v219 = vpack.c.b16 %v187, %v179
    %v220 = vpack.c.b16 %v188, %v180
    %v221 = vpack.c.b16 %v189, %v181
    %v222 = vpack.c.b16 %v190, %v182
    %v223 = vpack.c.b16 %v191, %v183
    %v224 = vpack.c.b16 %v192, %v184
    %vm257 = vcmask 523264
    %v259 = vsel %vm257, %v46, 0
    %261 = vmatpush.bf16.msra.mxu0 0
    %262 = vmatpush.bf16.msra.mxu0 0
    %263 = vmatpush.bf16.msra.mxu0 0
    %264 = vmatpush.bf16.msra.mxu0 0
    %265 = vmatpush.bf16.msra.mxu0 %v217
    %266 = vmatpush.bf16.msra.mxu0 %v209
    %267 = vmatpush.bf16.msra.mxu0 %v201
    %268 = vmatpush.bf16.msra.mxu0 %v193
    %269 = vmatmul.bf16.gmra.mxu0 %v259
    %v270 = vpop.f32.mrf.mxu0
    %v271 = vadd.f32 %v81, %v270
    %v272 = vpop.f32.mrf.mxu0
    %273 = vdwg.mxu0
    %274 = vmatpush.bf16.msra.mxu0 0
    %275 = vmatpush.bf16.msra.mxu0 0
    %276 = vmatpush.bf16.msra.mxu0 0
    %277 = vmatpush.bf16.msra.mxu0 0
    %278 = vmatpush.bf16.msra.mxu0 %v218
    %279 = vmatpush.bf16.msra.mxu0 %v210
    %280 = vmatpush.bf16.msra.mxu0 %v202
    %281 = vmatpush.bf16.msra.mxu0 %v194
    %282 = vmatmul.bf16.gmra.mxu0 %v259
    %v283 = vpop.f32.mrf.mxu0
    %v284 = vadd.f32 %v82, %v283
    %v285 = vpop.f32.mrf.mxu0
    %286 = vdwg.mxu0
    %287 = vmatpush.bf16.msra.mxu0 0
    %288 = vmatpush.bf16.msra.mxu0 0
    %289 = vmatpush.bf16.msra.mxu0 0
    %290 = vmatpush.bf16.msra.mxu0 0
    %291 = vmatpush.bf16.msra.mxu0 %v219
    %292 = vmatpush.bf16.msra.mxu0 %v211
    %293 = vmatpush.bf16.msra.mxu0 %v203
    %294 = vmatpush.bf16.msra.mxu0 %v195
    %295 = vmatmul.bf16.gmra.mxu0 %v259
    %v296 = vpop.f32.mrf.mxu0
    %v297 = vadd.f32 %v83, %v296
    %v298 = vpop.f32.mrf.mxu0
    %299 = vdwg.mxu0
    %300 = vmatpush.bf16.msra.mxu0 0
    %301 = vmatpush.bf16.msra.mxu0 0
    %302 = vmatpush.bf16.msra.mxu0 0
    %303 = vmatpush.bf16.msra.mxu0 0
    %304 = vmatpush.bf16.msra.mxu0 %v220
    %305 = vmatpush.bf16.msra.mxu0 %v212
    %306 = vmatpush.bf16.msra.mxu0 %v204
    %307 = vmatpush.bf16.msra.mxu0 %v196
    %308 = vmatmul.bf16.gmra.mxu0 %v259
    %v309 = vpop.f32.mrf.mxu0
    %v310 = vadd.f32 %v84, %v309
    %v311 = vpop.f32.mrf.mxu0
    %312 = vdwg.mxu0
    %313 = vmatpush.bf16.msra.mxu0 0
    %314 = vmatpush.bf16.msra.mxu0 0
    %315 = vmatpush.bf16.msra.mxu0 0
    %316 = vmatpush.bf16.msra.mxu0 0
    %317 = vmatpush.bf16.msra.mxu0 %v221
    %318 = vmatpush.bf16.msra.mxu0 %v213
    %319 = vmatpush.bf16.msra.mxu0 %v205
    %320 = vmatpush.bf16.msra.mxu0 %v197
    %321 = vmatmul.bf16.gmra.mxu0 %v259
    %v322 = vpop.f32.mrf.mxu0
    %v323 = vadd.f32 %v85, %v322
    %v324 = vpop.f32.mrf.mxu0
    %325 = vdwg.mxu0
    %326 = vmatpush.bf16.msra.mxu0 0
    %327 = vmatpush.bf16.msra.mxu0 0
    %328 = vmatpush.bf16.msra.mxu0 0
    %329 = vmatpush.bf16.msra.mxu0 0
    %330 = vmatpush.bf16.msra.mxu0 %v222
    %331 = vmatpush.bf16.msra.mxu0 %v214
    %332 = vmatpush.bf16.msra.mxu0 %v206
    %333 = vmatpush.bf16.msra.mxu0 %v198
    %334 = vmatmul.bf16.gmra.mxu0 %v259
    %v335 = vpop.f32.mrf.mxu0
    %v336 = vadd.f32 %v86, %v335
    %v337 = vpop.f32.mrf.mxu0
    %338 = vdwg.mxu0
    %339 = vmatpush.bf16.msra.mxu0 0
    %340 = vmatpush.bf16.msra.mxu0 0
    %341 = vmatpush.bf16.msra.mxu0 0
    %342 = vmatpush.bf16.msra.mxu0 0
    %343 = vmatpush.bf16.msra.mxu0 %v223
    %344 = vmatpush.bf16.msra.mxu0 %v215
    %345 = vmatpush.bf16.msra.mxu0 %v207
    %346 = vmatpush.bf16.msra.mxu0 %v199
    %347 = vmatmul.bf16.gmra.mxu0 %v259
    %v348 = vpop.f32.mrf.mxu0
    %v349 = vadd.f32 %v87, %v348
    %v350 = vpop.f32.mrf.mxu0
    %351 = vdwg.mxu0
    %352 = vmatpush.bf16.msra.mxu0 0
    %353 = vmatpush.bf16.msra.mxu0 0
    %354 = vmatpush.bf16.msra.mxu0 0
    %355 = vmatpush.bf16.msra.mxu0 0
    %356 = vmatpush.bf16.msra.mxu0 %v224
    %357 = vmatpush.bf16.msra.mxu0 %v216
    %358 = vmatpush.bf16.msra.mxu0 %v208
    %359 = vmatpush.bf16.msra.mxu0 %v200
    %360 = vmatmul.bf16.gmra.mxu0 %v259
    %v361 = vpop.f32.mrf.mxu0
    %v362 = vadd.f32 %v88, %v361
    %v363 = vpop.f32.mrf.mxu0
    %364 = vdwg.mxu0
    %v373 = vrot.slane %v284, 6
    %v374 = vrot.slane %v297, 4
    %v375 = vrot.slane %v310, 2
    %v376 = vrot.slane %v336, 6
    %v377 = vrot.slane %v349, 4
    %v378 = vrot.slane %v362, 2
    %vm379 = vcmask 1041408
    %v380 = vsel %vm379, %v271, %v373
    %vm381 = vcmask 1045508
    %v382 = vsel %vm381, %v374, %v375
    %vm383 = vcmask 1043456
    %v384 = vsel %vm383, %v380, %v382
    %v385 = vsel %vm379, %v323, %v376
    %v386 = vsel %vm381, %v377, %v378
    %v387 = vsel %vm383, %v385, %v386
    %390 = vst [vmem:[#allocation7] sm:$0xff] %v384
    %391 = vst [vmem:[#allocation7 + $0x8] sm:$0xff] %v387
    // Predicated region
    $region22: #{_hypernet_matmul.1} parent=1 // pred_check
      _
    $region23: #{_hypernet_matmul.1} parent=1 // pred_check_branch
      %393 = sbr.rel (0) target = $region25
    $region24: #{_hypernet_matmul.1} parent=1 // pred_region
      %395 = vsyncadd [#allocation4], 0
      %s397 = sshll.u32 [#allocation7], 4
      %s398 = int_to_ptr.vmem [resolvable:$true] %s397
      %s399 = sshll.u32 %s3, 4
      %s400 = int_to_ptr.hbm [resolvable:$true] %s399
      %402 = dma.vmem_to_hbm [thread:$0]  %s398, 256, %s400, [#allocation4]
    $region25: #{_hypernet_matmul.1} parent=1 // pred_fallthru
      _
    // Predicated region
    $region26: #{_hypernet_matmul.1} parent=1 // pred_check
      _
    $region27: #{_hypernet_matmul.1} parent=1 // pred_check_branch
      %404 = sbr.rel (0) target = $region29
    $region28: #{_hypernet_matmul.1} parent=1 // pred_region
      %406 = dma.done [#allocation4], 256
    $region29: #{_hypernet_matmul.1} parent=1 // pred_fallthru
      _
    %407 = vsyncpa [#allocation3], 1
    %408 = vsyncpa [#allocation6], 1
    %409 = vsyncpa [#allocation4], 1

</llo_original>
